<compile_context>
chip_gen: v5e
topology: v5e:2x2
jax: 0.10.0
libtpu: 0.0.40
codegen_flags: <defaults>
</compile_context>

<pallas_src>
import jax
import jax.numpy as jnp
from jax import lax
from jax.experimental import pallas as pl
from jax.experimental.pallas import tpu as pltpu


def _mlp_kernel(
    x_ref,
    w1_ref, b1_ref,
    w2_ref, b2_ref,
    w3_ref, b3_ref,
    w4_ref, b4_ref,
    o_ref,
):
    # x streamed in f32; cast to bf16 on the VPU here (hidden under the MXU)
    # instead of a separate wrapper-side cast+pad HBM pass.
    x = x_ref[...].astype(jnp.bfloat16)

    # Layer 1: fused (Linear + eval-mode BN) -> ReLU.  Dropout = identity.
    h = jnp.dot(x, w1_ref[...], preferred_element_type=jnp.float32)
    h = jnp.maximum(h + b1_ref[...], 0.0)

    # Layer 2
    h = jnp.dot(h.astype(jnp.bfloat16), w2_ref[...],
                preferred_element_type=jnp.float32)
    h = jnp.maximum(h + b2_ref[...], 0.0)

    # Layer 3
    h = jnp.dot(h.astype(jnp.bfloat16), w3_ref[...],
                preferred_element_type=jnp.float32)
    h = jnp.maximum(h + b3_ref[...], 0.0)

    # Output head Linear(64 -> 1) + Sigmoid, produced LANE-DENSE as a (1, TB)
    # row: y[0, n] = sum_k w4[0, k] * h[n, k].  Contracting the last dims of
    # both operands (trans-B matmul) gives the transposed result directly, so
    # the store is an unmasked full-lane vst instead of masked (TB,1) stores.
    y = lax.dot_general(
        w4_ref[...], h,
        dimension_numbers=(((1,), (1,)), ((), ())),
        preferred_element_type=jnp.float32)          # (1, TB)
    o_ref[...] = jax.nn.sigmoid(y + b4_ref[...]).astype(o_ref.dtype)


def _const_spec(shape):
    """Full-array block whose index never changes -> stays resident in VMEM."""
    return pl.BlockSpec(shape, lambda i: (0,) * len(shape))


def _pick_batch_tile(B):
    """Large batch tile (amortizes ~0.35us/step overhead) with >=2 grid steps
    when the batch allows; multiple of 8 sublanes; conservative for v7x VMEM."""
    TB_MAX = 2048
    if B >= 2 * TB_MAX:
        TB = TB_MAX
    else:
        TB = ((max(1, (B + 1) // 2) + 7) // 8) * 8
        TB = min(TB, TB_MAX)
    # If the batch is smaller than one tile, shrink to the full dim (allowed).
    return min(TB, B)


@jax.jit
def deep_metrics_regressor_forward(x, params):
    """Runs the whole MLP forward pass in one pipelined Pallas kernel."""
    (w1, b1, w2, b2, w3, b3, w4, b4) = params
    B, F = x.shape

    TB = _pick_batch_tile(B)
    num_tiles = (B + TB - 1) // TB
    Bp = num_tiles * TB

    h1, h2, h3 = w1.shape[1], w2.shape[1], w3.shape[1]
    flops = 2 * Bp * (F * h1 + h1 * h2 + h2 * h3 + h3)
    bytes_accessed = (B * F * x.dtype.itemsize        # x streamed as f32
                      + Bp * 4                        # lane-dense f32 output
                      + sum(int(p.size) * p.dtype.itemsize for p in params))
    cost = pl.CostEstimate(flops=flops, transcendentals=Bp,
                           bytes_accessed=bytes_accessed)

    out = pl.pallas_call(
        _mlp_kernel,
        out_shape=jax.ShapeDtypeStruct((num_tiles, 1, TB), jnp.float32),
        grid=(num_tiles,),
        in_specs=[
            pl.BlockSpec((TB, F), lambda i: (i, 0)),   # streamed batch tile
            _const_spec(w1.shape), _const_spec(b1.shape),
            _const_spec(w2.shape), _const_spec(b2.shape),
            _const_spec(w3.shape), _const_spec(b3.shape),
            _const_spec(w4.shape), _const_spec(b4.shape),
        ],
        # Leading tile dim squeezed; kernel sees a (1, TB) lane-dense block.
        out_specs=pl.BlockSpec((None, 1, TB), lambda i: (i, 0, 0)),
        compiler_params=pltpu.CompilerParams(
            dimension_semantics=("parallel",),
            vmem_limit_bytes=32 << 20,
        ),
        cost_estimate=cost,
    )(x, w1, b1, w2, b2, w3, b3, w4, b4)

    # (num_tiles, 1, TB) lane-dense rows -> (B, 1); garbage rows from the last
    # (possibly partial) batch tile are sliced off here.
    return out.reshape(Bp, 1)[:B]


def init_params(key, input_dim, hidden_dims=(256, 128, 64)):
    """PyTorch-like uniform fan-in init with eval-mode BN folded into Linear."""
    eps = 1e-5
    dims = [input_dim] + list(hidden_dims)
    params = []
    keys = jax.random.split(key, len(hidden_dims) + 1)

    for i in range(len(hidden_dims)):
        fan_in, fan_out = dims[i], dims[i + 1]
        kw, kb = jax.random.split(keys[i])
        bound = 1.0 / jnp.sqrt(fan_in)
        w = jax.random.uniform(kw, (fan_in, fan_out), jnp.float32, -bound, bound)
        b = jax.random.uniform(kb, (1, fan_out), jnp.float32, -bound, bound)
        # BatchNorm1d eval: gamma=1, beta=0, running_mean=0, running_var=1
        gamma = jnp.ones((1, fan_out), jnp.float32)
        beta = jnp.zeros((1, fan_out), jnp.float32)
        running_mean = jnp.zeros((1, fan_out), jnp.float32)
        running_var = jnp.ones((1, fan_out), jnp.float32)
        scale = gamma / jnp.sqrt(running_var + eps)
        shift = beta - running_mean * scale
        # Fold BN affine into the Linear: (xW + b)*s + t == x(W*s) + (b*s + t)
        w_fused = (w * scale).astype(jnp.bfloat16)
        b_fused = (b * scale + shift).astype(jnp.float32)
        params.extend([w_fused, b_fused])

    # Output head Linear(hidden_dims[-1] -> 1); kept f32, stored as a (1, 64)
    # row for the trans-B matmul that produces the lane-dense (1, TB) output.
    fan_in = hidden_dims[-1]
    kw, kb = jax.random.split(keys[-1])
    bound = 1.0 / jnp.sqrt(fan_in)
    w4 = jax.random.uniform(kw, (fan_in, 1), jnp.float32, -bound, bound)
    b4 = jax.random.uniform(kb, (1, 1), jnp.float32, -bound, bound)
    params.extend([w4.reshape(1, fan_in), b4])

    return tuple(params)


if __name__ == "__main__":
    key = jax.random.PRNGKey(0)
    k_x, k_p = jax.random.split(key)

    batch = 8
    input_dim = 32
    hidden_dims = (256, 128, 64)

    x = jax.random.normal(k_x, (batch, input_dim), dtype=jnp.float32)
    params = init_params(k_p, input_dim, hidden_dims)

    out = deep_metrics_regressor_forward(x, params)
    out = jax.block_until_ready(out)

    assert out.shape == (batch, 1)
    assert bool(jnp.all((out >= 0.0) & (out <= 1.0)))
    assert bool(jnp.all(jnp.isfinite(out)))
    print("KERNEL_OK")
</pallas_src>

<mosaic_0001>
module attributes {stable_mosaic.version = 11 : i64} {
  func.func @_mlp_kernel(%arg0: i32, %arg1: memref<8x32xf32, #tpu.memory_space<vmem>>, %arg2: memref<32x256xbf16, #tpu.memory_space<vmem>>, %arg3: memref<1x256xf32, #tpu.memory_space<vmem>>, %arg4: memref<256x128xbf16, #tpu.memory_space<vmem>>, %arg5: memref<1x128xf32, #tpu.memory_space<vmem>>, %arg6: memref<128x64xbf16, #tpu.memory_space<vmem>>, %arg7: memref<1x64xf32, #tpu.memory_space<vmem>>, %arg8: memref<1x64xf32, #tpu.memory_space<vmem>>, %arg9: memref<1x1xf32, #tpu.memory_space<vmem>>, %arg10: memref<1x1x8xf32, #tpu.memory_space<vmem>>) attributes {dimension_semantics = [#tpu.dimension_semantics<parallel>], iteration_bounds = array<i64: 1>, scalar_prefetch = 0 : i64, scratch_operands = 0 : i64, tpu.core_type = #tpu.core_type<tc>, window_params = [{transform_indices = @transform_0, window_bounds = array<i64: 8, 32>}, {pipeline_mode = #tpu.pipeline_mode<synchronous>, transform_indices = @transform_1, window_bounds = array<i64: 32, 256>}, {pipeline_mode = #tpu.pipeline_mode<synchronous>, transform_indices = @transform_2, window_bounds = array<i64: 1, 256>}, {pipeline_mode = #tpu.pipeline_mode<synchronous>, transform_indices = @transform_3, window_bounds = array<i64: 256, 128>}, {pipeline_mode = #tpu.pipeline_mode<synchronous>, transform_indices = @transform_4, window_bounds = array<i64: 1, 128>}, {pipeline_mode = #tpu.pipeline_mode<synchronous>, transform_indices = @transform_5, window_bounds = array<i64: 128, 64>}, {pipeline_mode = #tpu.pipeline_mode<synchronous>, transform_indices = @transform_6, window_bounds = array<i64: 1, 64>}, {pipeline_mode = #tpu.pipeline_mode<synchronous>, transform_indices = @transform_7, window_bounds = array<i64: 1, 64>}, {pipeline_mode = #tpu.pipeline_mode<synchronous>, transform_indices = @transform_8, window_bounds = array<i64: 1, 1>}, {transform_indices = @transform_9, window_bounds = array<i64: 1, 1, 8>}]} {
    %c0 = arith.constant 0 : index
    %c0_0 = arith.constant 0 : index
    %0 = vector.load %arg1[%c0, %c0_0] : memref<8x32xf32, #tpu.memory_space<vmem>>, vector<8x32xf32>
    %1 = arith.truncf %0 : vector<8x32xf32> to vector<8x32xbf16>
    %c0_1 = arith.constant 0 : index
    %c0_2 = arith.constant 0 : index
    %2 = vector.load %arg2[%c0_1, %c0_2] : memref<32x256xbf16, #tpu.memory_space<vmem>>, vector<32x256xbf16>
    %cst = arith.constant dense<0.000000e+00> : vector<8x256xf32>
    %3 = tpu.matmul %1, %2, %cst {dimension_numbers = #tpu.dot_dimension_numbers<[1], [0], [0], [1], [0, 0, 1, 1], [], []>} : vector<8x32xbf16>, vector<32x256xbf16>, vector<8x256xf32> -> vector<8x256xf32>
    %c0_3 = arith.constant 0 : index
    %c0_4 = arith.constant 0 : index
    %4 = vector.load %arg3[%c0_3, %c0_4] : memref<1x256xf32, #tpu.memory_space<vmem>>, vector<1x256xf32>
    %5 = vector.broadcast %4 : vector<1x256xf32> to vector<8x256xf32>
    %6 = arith.addf %3, %5 : vector<8x256xf32>
    %cst_5 = arith.constant 0.000000e+00 : f32
    %7 = vector.broadcast %cst_5 : f32 to vector<8x256xf32>
    %8 = arith.maximumf %6, %7 : vector<8x256xf32>
    %9 = arith.truncf %8 : vector<8x256xf32> to vector<8x256xbf16>
    %c0_6 = arith.constant 0 : index
    %c0_7 = arith.constant 0 : index
    %10 = vector.load %arg4[%c0_6, %c0_7] : memref<256x128xbf16, #tpu.memory_space<vmem>>, vector<256x128xbf16>
    %cst_8 = arith.constant dense<0.000000e+00> : vector<8x128xf32>
    %11 = tpu.matmul %9, %10, %cst_8 {dimension_numbers = #tpu.dot_dimension_numbers<[1], [0], [0], [1], [0, 0, 1, 1], [], []>} : vector<8x256xbf16>, vector<256x128xbf16>, vector<8x128xf32> -> vector<8x128xf32>
    %c0_9 = arith.constant 0 : index
    %c0_10 = arith.constant 0 : index
    %12 = vector.load %arg5[%c0_9, %c0_10] : memref<1x128xf32, #tpu.memory_space<vmem>>, vector<1x128xf32>
    %13 = vector.broadcast %12 : vector<1x128xf32> to vector<8x128xf32>
    %14 = arith.addf %11, %13 : vector<8x128xf32>
    %cst_11 = arith.constant 0.000000e+00 : f32
    %15 = vector.broadcast %cst_11 : f32 to vector<8x128xf32>
    %16 = arith.maximumf %14, %15 : vector<8x128xf32>
    %17 = arith.truncf %16 : vector<8x128xf32> to vector<8x128xbf16>
    %c0_12 = arith.constant 0 : index
    %c0_13 = arith.constant 0 : index
    %18 = vector.load %arg6[%c0_12, %c0_13] : memref<128x64xbf16, #tpu.memory_space<vmem>>, vector<128x64xbf16>
    %cst_14 = arith.constant dense<0.000000e+00> : vector<8x64xf32>
    %19 = tpu.matmul %17, %18, %cst_14 {dimension_numbers = #tpu.dot_dimension_numbers<[1], [0], [0], [1], [0, 0, 1, 1], [], []>} : vector<8x128xbf16>, vector<128x64xbf16>, vector<8x64xf32> -> vector<8x64xf32>
    %c0_15 = arith.constant 0 : index
    %c0_16 = arith.constant 0 : index
    %20 = vector.load %arg7[%c0_15, %c0_16] : memref<1x64xf32, #tpu.memory_space<vmem>>, vector<1x64xf32>
    %21 = vector.broadcast %20 : vector<1x64xf32> to vector<8x64xf32>
    %22 = arith.addf %19, %21 : vector<8x64xf32>
    %cst_17 = arith.constant 0.000000e+00 : f32
    %23 = vector.broadcast %cst_17 : f32 to vector<8x64xf32>
    %24 = arith.maximumf %22, %23 : vector<8x64xf32>
    %c0_18 = arith.constant 0 : index
    %c0_19 = arith.constant 0 : index
    %25 = vector.load %arg8[%c0_18, %c0_19] : memref<1x64xf32, #tpu.memory_space<vmem>>, vector<1x64xf32>
    %cst_20 = arith.constant dense<0.000000e+00> : vector<1x8xf32>
    %26 = tpu.matmul %25, %24, %cst_20 {dimension_numbers = #tpu.dot_dimension_numbers<[1], [1], [0], [0], [0, 0, 1, 0], [], []>} : vector<1x64xf32>, vector<8x64xf32>, vector<1x8xf32> -> vector<1x8xf32>
    %c0_21 = arith.constant 0 : index
    %c0_22 = arith.constant 0 : index
    %27 = vector.load %arg9[%c0_21, %c0_22] : memref<1x1xf32, #tpu.memory_space<vmem>>, vector<1x1xf32>
    %28 = vector.broadcast %27 : vector<1x1xf32> to vector<1x8xf32>
    %29 = arith.addf %26, %28 : vector<1x8xf32>
    %30 = arith.negf %29 : vector<1x8xf32>
    %31 = math.exp %30 : vector<1x8xf32>
    %cst_23 = arith.constant 1.000000e+00 : f32
    %32 = vector.broadcast %cst_23 : f32 to vector<1x8xf32>
    %33 = arith.addf %32, %31 : vector<1x8xf32>
    %34 = arith.divf %32, %33 : vector<1x8xf32>
    %c0_24 = arith.constant 0 : index
    %c0_25 = arith.constant 0 : index
    %c0_26 = arith.constant 0 : index
    %35 = vector.load %arg10[%c0_24, %c0_25, %c0_26] : memref<1x1x8xf32, #tpu.memory_space<vmem>>, vector<1x1x8xf32>
    %36 = vector.shape_cast %35 : vector<1x1x8xf32> to vector<1x8xf32>
    %37 = vector.shape_cast %34 : vector<1x8xf32> to vector<1x1x8xf32>
    tpu.vector_store %arg10[%c0_24, %c0_25, %c0_26], %37 {strides = array<i32>} : memref<1x1x8xf32, #tpu.memory_space<vmem>>, vector<1x1x8xf32>,
    return
  }
  func.func @transform_0(%arg0: i32) -> (i32, i32) {
    %c0_i32 = arith.constant 0 : i32
    %c0_i32_0 = arith.constant 0 : i32
    return %arg0, %c0_i32 : i32, i32
  }
  func.func @transform_1(%arg0: i32) -> (i32, i32) {
    %c0_i32 = arith.constant 0 : i32
    %c0_i32_0 = arith.constant 0 : i32
    %c0_i32_1 = arith.constant 0 : i32
    return %c0_i32, %c0_i32_0 : i32, i32
  }
  func.func @transform_2(%arg0: i32) -> (i32, i32) {
    %c0_i32 = arith.constant 0 : i32
    %c0_i32_0 = arith.constant 0 : i32
    %c0_i32_1 = arith.constant 0 : i32
    return %c0_i32, %c0_i32_0 : i32, i32
  }
  func.func @transform_3(%arg0: i32) -> (i32, i32) {
    %c0_i32 = arith.constant 0 : i32
    %c0_i32_0 = arith.constant 0 : i32
    %c0_i32_1 = arith.constant 0 : i32
    return %c0_i32, %c0_i32_0 : i32, i32
  }
  func.func @transform_4(%arg0: i32) -> (i32, i32) {
    %c0_i32 = arith.constant 0 : i32
    %c0_i32_0 = arith.constant 0 : i32
    %c0_i32_1 = arith.constant 0 : i32
    return %c0_i32, %c0_i32_0 : i32, i32
  }
  func.func @transform_5(%arg0: i32) -> (i32, i32) {
    %c0_i32 = arith.constant 0 : i32
    %c0_i32_0 = arith.constant 0 : i32
    %c0_i32_1 = arith.constant 0 : i32
    return %c0_i32, %c0_i32_0 : i32, i32
  }
  func.func @transform_6(%arg0: i32) -> (i32, i32) {
    %c0_i32 = arith.constant 0 : i32
    %c0_i32_0 = arith.constant 0 : i32
    %c0_i32_1 = arith.constant 0 : i32
    return %c0_i32, %c0_i32_0 : i32, i32
  }
  func.func @transform_7(%arg0: i32) -> (i32, i32) {
    %c0_i32 = arith.constant 0 : i32
    %c0_i32_0 = arith.constant 0 : i32
    %c0_i32_1 = arith.constant 0 : i32
    return %c0_i32, %c0_i32_0 : i32, i32
  }
  func.func @transform_8(%arg0: i32) -> (i32, i32) {
    %c0_i32 = arith.constant 0 : i32
    %c0_i32_0 = arith.constant 0 : i32
    %c0_i32_1 = arith.constant 0 : i32
    return %c0_i32, %c0_i32_0 : i32, i32
  }
  func.func @transform_9(%arg0: i32) -> (i32, i32, i32) {
    %c0_i32 = arith.constant 0 : i32
    %c0_i32_0 = arith.constant 0 : i32
    %c0_i32_1 = arith.constant 0 : i32
    return %arg0, %c0_i32, %c0_i32_0 : i32, i32, i32
  }
}

</mosaic_0001>

<llo_original>
// kernel: deep_metrics_regressor_forward.1
$region0: #{deep_metrics_regressor_forward.1}
  #allocation0 [shape = 'u32[]', space=smem, size = 0x4, offset = 0x4, fixed_abs, tag = 'smem constant byte address 0x4 - core index']
  #allocation1 [shape = 'u32[72,128]{1,0:T(1,128)}', space=vmem, size = 0x9000, scoped, tag = 'internal scratch']
  #allocation2 [shape = 'f32[1,1]{1,0:T(1,128)S(1)}', space=vmem, size = 0x200, scoped, tag = 'scoped memory for deep_metrics_regressor_forward.1']
  %s0 = inlined_call_operand.vmem [shape: f32[8,32], index: 0, kind: input, shape index: {}]
  %s1 = inlined_call_operand.vmem [shape: bf16[32,256], index: 1, kind: input, shape index: {}]
  %s2 = inlined_call_operand.vmem [shape: f32[1,256], index: 2, kind: input, shape index: {}]
  %s3 = inlined_call_operand.hbm [shape: bf16[256,128], index: 3, kind: input, shape index: {}]
  %s4 = inlined_call_operand.vmem [shape: f32[1,128], index: 4, kind: input, shape index: {}]
  %s5 = inlined_call_operand.vmem [shape: bf16[128,64], index: 5, kind: input, shape index: {}]
  %s6 = inlined_call_operand.vmem [shape: f32[1,64], index: 6, kind: input, shape index: {}]
  %s7 = inlined_call_operand.vmem [shape: f32[1,64], index: 7, kind: input, shape index: {}]
  %s8 = inlined_call_operand.<no memory space> [shape: f32[1,1], index: 8, kind: input, shape index: {}]
  %s9 = inlined_call_operand.hbm [shape: f32[1,1,8], index: 9, kind: output, shape index: {}]
  %s10 = sld [smem:[#allocation0]]
  $region50: #{deep_metrics_regressor_forward.1} parent=0
    _
  %s12 = ssub.s32 1, %s10
  %s13 = scalar_select 0, %s12, %s10
  %v14 = vstv %s8
  %15 = vst [vmem:[#allocation2] sm:$0x1] %v14
  $region1: #{deep_metrics_regressor_forward.1} parent=0
    #allocation3 [shape = 'u8[65536]{0}', space=vmem, size = 0x10000, scoped, tag = 'input window, operand 3, single buffered']
    #allocation4 [shape = 's32[1]{0}', space=sflag, size = 0x4, scoped, tag = 'scoped memory for deep_metrics_regressor_forward.1']
    #allocation5 [shape = 's32[1]{0}', space=sflag, size = 0x4, scoped, tag = 'scoped memory for deep_metrics_regressor_forward.1']
    #allocation6 [shape = 'u8[512]{0}', space=vmem, size = 0x400, scoped, tag = 'output window, operand 0, single buffered']
    %16 = vsyncpa [#allocation4], 0
    %17 = vsyncpa [#allocation5], 0
    // Predicated region
    $region2: #{deep_metrics_regressor_forward.1} parent=1 // pred_check
      _
    $region3: #{deep_metrics_regressor_forward.1} parent=1 // pred_check_branch
      %19 = sbr.rel (0) target = $region5
    $region4: #{deep_metrics_regressor_forward.1} parent=1 // pred_region
      _
    $region5: #{deep_metrics_regressor_forward.1} parent=1 // pred_fallthru
      _
    // Predicated region
    $region6: #{deep_metrics_regressor_forward.1} parent=1 // pred_check
      _
    $region7: #{deep_metrics_regressor_forward.1} parent=1 // pred_check_branch
      %21 = sbr.rel (0) target = $region9
    $region8: #{deep_metrics_regressor_forward.1} parent=1 // pred_region
      _
    $region9: #{deep_metrics_regressor_forward.1} parent=1 // pred_fallthru
      _
    // Predicated region
    $region10: #{deep_metrics_regressor_forward.1} parent=1 // pred_check
      _
    $region11: #{deep_metrics_regressor_forward.1} parent=1 // pred_check_branch
      %23 = sbr.rel (0) target = $region13
    $region12: #{deep_metrics_regressor_forward.1} parent=1 // pred_region
      _
    $region13: #{deep_metrics_regressor_forward.1} parent=1 // pred_fallthru
      _
    // Predicated region
    $region14: #{deep_metrics_regressor_forward.1} parent=1 // pred_check
      _
    $region15: #{deep_metrics_regressor_forward.1} parent=1 // pred_check_branch
      %25 = sbr.rel (0) target = $region17
    $region16: #{deep_metrics_regressor_forward.1} parent=1 // pred_region
      %27 = vsyncadd [#allocation4], 0
      %s28 = sshll.u32 %s3, 4
      %s29 = int_to_ptr.hbm [resolvable:$true] %s28
      %s30 = sshll.u32 [#allocation3], 4
      %s31 = int_to_ptr.vmem [resolvable:$true] %s30
      %36 = dma.hbm_to_vmem [thread:$0]  %s29, 2048, %s31, [#allocation4], 64, 64, 4
    $region17: #{deep_metrics_regressor_forward.1} parent=1 // pred_fallthru
      _
    // Predicated region
    $region18: #{deep_metrics_regressor_forward.1} parent=1 // pred_check
      _
    $region19: #{deep_metrics_regressor_forward.1} parent=1 // pred_check_branch
      %38 = sbr.rel (0) target = $region21
    $region20: #{deep_metrics_regressor_forward.1} parent=1 // pred_region
      _
    $region21: #{deep_metrics_regressor_forward.1} parent=1 // pred_fallthru
      _
    // Predicated region
    $region22: #{deep_metrics_regressor_forward.1} parent=1 // pred_check
      _
    $region23: #{deep_metrics_regressor_forward.1} parent=1 // pred_check_branch
      %40 = sbr.rel (0) target = $region25
    $region24: #{deep_metrics_regressor_forward.1} parent=1 // pred_region
      _
    $region25: #{deep_metrics_regressor_forward.1} parent=1 // pred_fallthru
      _
    // Predicated region
    $region26: #{deep_metrics_regressor_forward.1} parent=1 // pred_check
      _
    $region27: #{deep_metrics_regressor_forward.1} parent=1 // pred_check_branch
      %42 = sbr.rel (0) target = $region29
    $region28: #{deep_metrics_regressor_forward.1} parent=1 // pred_region
      _
    $region29: #{deep_metrics_regressor_forward.1} parent=1 // pred_fallthru
      _
    // Predicated region
    $region30: #{deep_metrics_regressor_forward.1} parent=1 // pred_check
      _
    $region31: #{deep_metrics_regressor_forward.1} parent=1 // pred_check_branch
      %44 = sbr.rel (0) target = $region33
    $region32: #{deep_metrics_regressor_forward.1} parent=1 // pred_region
      _
    $region33: #{deep_metrics_regressor_forward.1} parent=1 // pred_fallthru
      _
    // Predicated region
    $region34: #{deep_metrics_regressor_forward.1} parent=1 // pred_check
      _
    $region35: #{deep_metrics_regressor_forward.1} parent=1 // pred_check_branch
      %46 = sbr.rel (0) target = $region37
    $region36: #{deep_metrics_regressor_forward.1} parent=1 // pred_region
      _
    $region37: #{deep_metrics_regressor_forward.1} parent=1 // pred_fallthru
      _
    // Predicated region
    $region38: #{deep_metrics_regressor_forward.1} parent=1 // pred_check
      _
    $region39: #{deep_metrics_regressor_forward.1} parent=1 // pred_check_branch
      %48 = sbr.rel (0) target = $region41
    $region40: #{deep_metrics_regressor_forward.1} parent=1 // pred_region
      %50 = dma.done [#allocation4], 2048
    $region41: #{deep_metrics_regressor_forward.1} parent=1 // pred_fallthru
      _
    %v52 = vld [vmem:[%s0] sm:$0xff]
    %v53 = vpack.c.bf16 %v52, %v52
    %v54 = vld [vmem:[%s1] sm:$0xff]
    %v55 = vld [vmem:[%s1 + $0x8] sm:$0xff]
    %v56 = vld [vmem:[%s1 + $0x10] sm:$0xff]
    %v57 = vld [vmem:[%s1 + $0x18] sm:$0xff]
    %v58 = vld [vmem:[%s2] sm:$0x3]
    %v60 = vperm.slane %v58, 0
    %v61 = vperm.slane %v58, 1
    %v68 = vunpack.c.l.b16 %v54
    %v69 = vunpack.c.h.b16 %v54
    %v70 = vunpack.c.l.b16 %v55
    %v71 = vunpack.c.h.b16 %v55
    %v72 = vunpack.c.l.b16 %v56
    %v73 = vunpack.c.h.b16 %v56
    %v74 = vunpack.c.l.b16 %v57
    %v75 = vunpack.c.h.b16 %v57
    %v76 = vpack.c.b16 %v70, %v68
    %v77 = vpack.c.b16 %v71, %v69
    %v78 = vpack.c.b16 %v74, %v72
    %v79 = vpack.c.b16 %v75, %v73
    %vm84 = vcmask 261120
    %v86 = vsel %vm84, %v53, 0
    %88 = vmatpush.bf16.msra.mxu0 0
    %89 = vmatpush.bf16.msra.mxu0 0
    %90 = vmatpush.bf16.msra.mxu0 0
    %91 = vmatpush.bf16.msra.mxu0 0
    %92 = vmatpush.bf16.msra.mxu0 0
    %93 = vmatpush.bf16.msra.mxu0 0
    %94 = vmatpush.bf16.msra.mxu0 %v78
    %95 = vmatpush.bf16.msra.mxu0 %v76
    %96 = vmatmul.bf16.gmra.mxu0 %v86
    %v97 = vpop.f32.mrf.mxu0
    %v98 = vadd.f32 %v60, %v97
    %v99 = vpop.f32.mrf.mxu0
    %100 = vdwg.mxu0
    %101 = vmatpush.bf16.msra.mxu0 0
    %102 = vmatpush.bf16.msra.mxu0 0
    %103 = vmatpush.bf16.msra.mxu0 0
    %104 = vmatpush.bf16.msra.mxu0 0
    %105 = vmatpush.bf16.msra.mxu0 0
    %106 = vmatpush.bf16.msra.mxu0 0
    %107 = vmatpush.bf16.msra.mxu0 %v79
    %108 = vmatpush.bf16.msra.mxu0 %v77
    %109 = vmatmul.bf16.gmra.mxu0 %v86
    %v110 = vpop.f32.mrf.mxu0
    %v111 = vadd.f32 %v61, %v110
    %v112 = vpop.f32.mrf.mxu0
    %113 = vdwg.mxu0
    %v114 = vmax.f32 %v98, 0.0
    %v115 = vmax.f32 %v111, 0.0
    %v116 = vpack.c.bf16 %v114, %v114
    %v117 = vpack.c.bf16 %v115, %v115
    %v118 = vld [vmem:[#allocation3] sm:$0xf]
    %v119 = vld [vmem:[#allocation3 + $0x4] sm:$0xf]
    %v120 = vld [vmem:[#allocation3 + $0x8] sm:$0xf]
    %v121 = vld [vmem:[#allocation3 + $0xc] sm:$0xf]
    %v122 = vld [vmem:[#allocation3 + $0x10] sm:$0xf]
    %v123 = vld [vmem:[#allocation3 + $0x14] sm:$0xf]
    %v124 = vld [vmem:[#allocation3 + $0x18] sm:$0xf]
    %v125 = vld [vmem:[#allocation3 + $0x1c] sm:$0xf]
    %v126 = vld [vmem:[#allocation3 + $0x20] sm:$0xf]
    %v127 = vld [vmem:[#allocation3 + $0x24] sm:$0xf]
    %v128 = vld [vmem:[#allocation3 + $0x28] sm:$0xf]
    %v129 = vld [vmem:[#allocation3 + $0x2c] sm:$0xf]
    %v130 = vld [vmem:[#allocation3 + $0x30] sm:$0xf]
    %v131 = vld [vmem:[#allocation3 + $0x34] sm:$0xf]
    %v132 = vld [vmem:[#allocation3 + $0x38] sm:$0xf]
    %v133 = vld [vmem:[#allocation3 + $0x3c] sm:$0xf]
    %v134 = vld [vmem:[#allocation3 + $0x40] sm:$0xf]
    %v135 = vld [vmem:[#allocation3 + $0x44] sm:$0xf]
    %v136 = vld [vmem:[#allocation3 + $0x48] sm:$0xf]
    %v137 = vld [vmem:[#allocation3 + $0x4c] sm:$0xf]
    %v138 = vld [vmem:[#allocation3 + $0x50] sm:$0xf]
    %v139 = vld [vmem:[#allocation3 + $0x54] sm:$0xf]
    %v140 = vld [vmem:[#allocation3 + $0x58] sm:$0xf]
    %v141 = vld [vmem:[#allocation3 + $0x5c] sm:$0xf]
    %v142 = vld [vmem:[#allocation3 + $0x60] sm:$0xf]
    %v143 = vld [vmem:[#allocation3 + $0x64] sm:$0xf]
    %v144 = vld [vmem:[#allocation3 + $0x68] sm:$0xf]
    %v145 = vld [vmem:[#allocation3 + $0x6c] sm:$0xf]
    %v146 = vld [vmem:[#allocation3 + $0x70] sm:$0xf]
    %v147 = vld [vmem:[#allocation3 + $0x74] sm:$0xf]
    %v148 = vld [vmem:[#allocation3 + $0x78] sm:$0xf]
    %v149 = vld [vmem:[#allocation3 + $0x7c] sm:$0xf]
    %v150 = vld [vmem:[%s4] sm:$0x1]
    %v152 = vperm.slane %v150, 0
    %v186 = vunpack.c.l.b16 %v118
    %v187 = vunpack.c.l.b16 %v119
    %v188 = vunpack.c.l.b16 %v120
    %v189 = vunpack.c.l.b16 %v121
    %v190 = vunpack.c.l.b16 %v122
    %v191 = vunpack.c.l.b16 %v123
    %v192 = vunpack.c.l.b16 %v124
    %v193 = vunpack.c.l.b16 %v125
    %v194 = vunpack.c.l.b16 %v126
    %v195 = vunpack.c.l.b16 %v127
    %v196 = vunpack.c.l.b16 %v128
    %v197 = vunpack.c.l.b16 %v129
    %v198 = vunpack.c.l.b16 %v130
    %v199 = vunpack.c.l.b16 %v131
    %v200 = vunpack.c.l.b16 %v132
    %v201 = vunpack.c.l.b16 %v133
    %v202 = vunpack.c.l.b16 %v134
    %v203 = vunpack.c.l.b16 %v135
    %v204 = vunpack.c.l.b16 %v136
    %v205 = vunpack.c.l.b16 %v137
    %v206 = vunpack.c.l.b16 %v138
    %v207 = vunpack.c.l.b16 %v139
    %v208 = vunpack.c.l.b16 %v140
    %v209 = vunpack.c.l.b16 %v141
    %v210 = vunpack.c.l.b16 %v142
    %v211 = vunpack.c.l.b16 %v143
    %v212 = vunpack.c.l.b16 %v144
    %v213 = vunpack.c.l.b16 %v145
    %v214 = vunpack.c.l.b16 %v146
    %v215 = vunpack.c.l.b16 %v147
    %v216 = vunpack.c.l.b16 %v148
    %v217 = vunpack.c.l.b16 %v149
    %v218 = vpack.c.b16 %v187, %v186
    %v219 = vpack.c.b16 %v189, %v188
    %v220 = vpack.c.b16 %v191, %v190
    %v221 = vpack.c.b16 %v193, %v192
    %v222 = vpack.c.b16 %v195, %v194
    %v223 = vpack.c.b16 %v197, %v196
    %v224 = vpack.c.b16 %v199, %v198
    %v225 = vpack.c.b16 %v201, %v200
    %v226 = vpack.c.b16 %v203, %v202
    %v227 = vpack.c.b16 %v205, %v204
    %v228 = vpack.c.b16 %v207, %v206
    %v229 = vpack.c.b16 %v209, %v208
    %v230 = vpack.c.b16 %v211, %v210
    %v231 = vpack.c.b16 %v213, %v212
    %v232 = vpack.c.b16 %v215, %v214
    %v233 = vpack.c.b16 %v217, %v216
    %250 = vmatpush.bf16.msra.mxu0 %v225
    %251 = vmatpush.bf16.msra.mxu0 %v224
    %252 = vmatpush.bf16.msra.mxu0 %v223
    %253 = vmatpush.bf16.msra.mxu0 %v222
    %254 = vmatpush.bf16.msra.mxu0 %v221
    %255 = vmatpush.bf16.msra.mxu0 %v220
    %256 = vmatpush.bf16.msra.mxu0 %v219
    %257 = vmatpush.bf16.msra.mxu0 %v218
    %258 = vmatmul.bf16.gmra.mxu0 %v116
    %v259 = vpop.f32.mrf.mxu0
    %v260 = vadd.f32 %v152, %v259
    %v261 = vpop.f32.mrf.mxu0
    %262 = vdwg.mxu0
    %263 = vmatpush.bf16.msra.mxu0 %v233
    %264 = vmatpush.bf16.msra.mxu0 %v232
    %265 = vmatpush.bf16.msra.mxu0 %v231
    %266 = vmatpush.bf16.msra.mxu0 %v230
    %267 = vmatpush.bf16.msra.mxu0 %v229
    %268 = vmatpush.bf16.msra.mxu0 %v228
    %269 = vmatpush.bf16.msra.mxu0 %v227
    %270 = vmatpush.bf16.msra.mxu0 %v226
    %271 = vmatmul.bf16.gmra.mxu0 %v117
    %v272 = vpop.f32.mrf.mxu0
    %v273 = vadd.f32 %v260, %v272
    %v274 = vpop.f32.mrf.mxu0
    %275 = vdwg.mxu0
    %v276 = vmax.f32 %v273, 0.0
    %v277 = vpack.c.bf16 %v276, %v276
    %v278 = vld [vmem:[%s5] sm:$0xf]
    %v279 = vld [vmem:[%s5 + $0x4] sm:$0xf]
    %v280 = vld [vmem:[%s5 + $0x8] sm:$0xf]
    %v281 = vld [vmem:[%s5 + $0xc] sm:$0xf]
    %v282 = vld [vmem:[%s5 + $0x10] sm:$0xf]
    %v283 = vld [vmem:[%s5 + $0x14] sm:$0xf]
    %v284 = vld [vmem:[%s5 + $0x18] sm:$0xf]
    %v285 = vld [vmem:[%s5 + $0x1c] sm:$0xf]
    %v286 = vld [vmem:[%s5 + $0x20] sm:$0xf]
    %v287 = vld [vmem:[%s5 + $0x24] sm:$0xf]
    %v288 = vld [vmem:[%s5 + $0x28] sm:$0xf]
    %v289 = vld [vmem:[%s5 + $0x2c] sm:$0xf]
    %v290 = vld [vmem:[%s5 + $0x30] sm:$0xf]
    %v291 = vld [vmem:[%s5 + $0x34] sm:$0xf]
    %v292 = vld [vmem:[%s5 + $0x38] sm:$0xf]
    %v293 = vld [vmem:[%s5 + $0x3c] sm:$0xf]
    %v294 = vld [vmem:[%s6] sm:$0x1]
    %v296 = vperm.slane %v294, 0
    %v314 = vunpack.c.l.b16 %v278
    %v315 = vunpack.c.l.b16 %v279
    %v316 = vunpack.c.l.b16 %v280
    %v317 = vunpack.c.l.b16 %v281
    %v318 = vunpack.c.l.b16 %v282
    %v319 = vunpack.c.l.b16 %v283
    %v320 = vunpack.c.l.b16 %v284
    %v321 = vunpack.c.l.b16 %v285
    %v322 = vunpack.c.l.b16 %v286
    %v323 = vunpack.c.l.b16 %v287
    %v324 = vunpack.c.l.b16 %v288
    %v325 = vunpack.c.l.b16 %v289
    %v326 = vunpack.c.l.b16 %v290
    %v327 = vunpack.c.l.b16 %v291
    %v328 = vunpack.c.l.b16 %v292
    %v329 = vunpack.c.l.b16 %v293
    %v330 = vpack.c.b16 %v315, %v314
    %v331 = vpack.c.b16 %v317, %v316
    %v332 = vpack.c.b16 %v319, %v318
    %v333 = vpack.c.b16 %v321, %v320
    %v334 = vpack.c.b16 %v323, %v322
    %v335 = vpack.c.b16 %v325, %v324
    %v336 = vpack.c.b16 %v327, %v326
    %v337 = vpack.c.b16 %v329, %v328
    %346 = vmatpush.bf16.msra.mxu0 %v337
    %347 = vmatpush.bf16.msra.mxu0 %v336
    %348 = vmatpush.bf16.msra.mxu0 %v335
    %349 = vmatpush.bf16.msra.mxu0 %v334
    %350 = vmatpush.bf16.msra.mxu0 %v333
    %351 = vmatpush.bf16.msra.mxu0 %v332
    %352 = vmatpush.bf16.msra.mxu0 %v331
    %353 = vmatpush.bf16.msra.mxu0 %v330
    %354 = vmatmul.bf16.gmra.mxu0 %v277
    %v355 = vpop.f32.mrf.mxu0
    %v356 = vadd.f32 %v296, %v355
    %v357 = vpop.f32.mrf.mxu0
    %358 = vdwg.mxu0
    %v359 = vmax.f32 %v356, 0.0
    %v360 = vld [vmem:[%s7] sm:$0x1]
    %v361 = vld [vmem:[#allocation2] sm:$0x1]
    %363 = vset.pattern.permute.xlu0 0
    %364 = vperm.xlu0 %363, %v361
    %v365 = vpop.permute.xlu0 %364
    %v367 = vperm.slane %v365, 0
    %vm368 = vcmask 523264
    %v370 = vsel %vm368, %v360, 0
    %v373 = vsel %vm368, %v359, 0
    %375 = vmatpush.xpose.msra.mxu0 0.0
    %376 = vmatpush.xpose.msra.mxu0 0.0
    %377 = vmatpush.xpose.msra.mxu0 0.0
    %378 = vmatpush.xpose.msra.mxu0 0.0
    %379 = vmatpush.xpose.msra.mxu0 0.0
    %380 = vmatpush.xpose.msra.mxu0 0.0
    %381 = vmatpush.xpose.msra.mxu0 0.0
    %382 = vmatpush.xpose.msra.mxu0 0.0
    %383 = vmatpush.xpose.msra.mxu0 0.0
    %384 = vmatpush.xpose.msra.mxu0 0.0
    %385 = vmatpush.xpose.msra.mxu0 0.0
    %386 = vmatpush.xpose.msra.mxu0 0.0
    %387 = vmatpush.xpose.msra.mxu0 0.0
    %388 = vmatpush.xpose.msra.mxu0 0.0
    %389 = vmatpush.xpose.msra.mxu0 0.0
    %390 = vmatpush.xpose.msra.mxu0 %v373
    %391 = vmatmul.f32.gmra.mxu0 %v370
    %v392 = vpop.f32.mrf.mxu0
    %v393 = vadd.f32 %v367, %v392
    %394 = vdwg.mxu0
    %v395 = vxor.u32 %v393, 2147483648
    %v396 = vmul.f32 %v395, 1.442695
    %v397 = vpow.pop %v396
    %v398 = vadd.f32 %v397, 1.0
    %v399 = vrcp.pop %v398
    %v400 = vmul.f32 %v398, %v399
    %v401 = vsub.f32 1.0, %v400
    %v402 = vmul.f32 %v399, %v401
    %v403 = vadd.f32 %v399, %v402
    %vm404 = vweird.f32 %v398
    %vm405 = vweird.f32 %v399
    %vm406 = vmor %vm404, %vm405
    %v407 = vsel %vm406, %v399, %v403
    %v408 = vand.u32 2147483647, %v398
    %vm409 = vcmp.eq.f32.partialorder %v408, 8.507059e+37
    %v410 = vand.u32 %v398, 2147483648
    %v411 = vor.u32 1.1754944e-38, %v410
    %v412 = vsel %vm409, %v411, %v407
    %v413 = vmul.f32 1.0, %v412
    %vm414 = vcmask 57344
    %415 = vst.msk [vmem:[#allocation6] sm:$0x1] %vm414, %v413
    // Predicated region
    $region42: #{deep_metrics_regressor_forward.1} parent=1 // pred_check
      _
    $region43: #{deep_metrics_regressor_forward.1} parent=1 // pred_check_branch
      %417 = sbr.rel (0) target = $region45
    $region44: #{deep_metrics_regressor_forward.1} parent=1 // pred_region
      %419 = vsyncadd [#allocation5], 0
      %s421 = sshll.u32 [#allocation6], 4
      %s422 = int_to_ptr.vmem [resolvable:$true] %s421
      %s423 = sshll.u32 %s9, 4
      %s424 = int_to_ptr.hbm [resolvable:$true] %s423
      %426 = dma.vmem_to_hbm [thread:$0]  %s422, 16, %s424, [#allocation5]
    $region45: #{deep_metrics_regressor_forward.1} parent=1 // pred_fallthru
      _
    // Predicated region
    $region46: #{deep_metrics_regressor_forward.1} parent=1 // pred_check
      _
    $region47: #{deep_metrics_regressor_forward.1} parent=1 // pred_check_branch
      %428 = sbr.rel (0) target = $region49
    $region48: #{deep_metrics_regressor_forward.1} parent=1 // pred_region
      %430 = dma.done [#allocation5], 16
    $region49: #{deep_metrics_regressor_forward.1} parent=1 // pred_fallthru
      _
    %431 = vsyncpa [#allocation4], 1
    %432 = vsyncpa [#allocation5], 1

</llo_original>
